<compile_context>
chip_gen: v7x
topology: tpu7x:2x2x1
jax: 0.10.0
libtpu: 0.0.40
codegen_flags: <defaults>
</compile_context>

<pallas_src>
import jax
import jax.numpy as jnp
from jax.experimental import pallas as pl
from jax.experimental.pallas import tpu as pltpu


def _compress_kernel(emb_ref, mask_ref, w_ref, cmpr_ref, dec_ref):
    """compress(): masked mean-pool + tanh projection. One sentence per grid step.

    emb_ref  : (1, S, H) bf16  teacher-forced token embeddings
    mask_ref : (1, S, 1) f32   attention mask
    w_ref    : (H, H)    f32   compression -> decoder projection
    cmpr_ref : (1, 1, H) f32   compressed sentence vector (out)
    dec_ref  : (1, 1, H) bf16  decoder conditioning tanh(cmpr @ W) (out)
    """
    emb = emb_ref[0].astype(jnp.float32)                             # (S, H)
    mask = mask_ref[0]                                               # (S, 1)
    denom = jnp.maximum(jnp.sum(mask), 1.0)
    cmpr = jnp.sum(emb * mask, axis=0, keepdims=True) / denom        # (1, H)
    dec = jnp.tanh(jnp.dot(cmpr, w_ref[...],
                           preferred_element_type=jnp.float32))      # (1, H)
    cmpr_ref[0] = cmpr
    dec_ref[0] = dec.astype(dec_ref.dtype)


def _logits_kernel(emb_ref, dec_ref, et_ref, out_ref):
    """causal_lm() logits tile: hidden = emb + dec ; logits = hidden @ E^T.

    emb_ref : (1, ts, H)  bf16   token-embedding tile of one sentence
    dec_ref : (1, 1, H)   bf16   broadcast decoder conditioning for this sentence
    et_ref  : (H, tv)     bf16   pre-transposed tied embedding table tile
    out_ref : (1, ts, tv) bf16   logits tile (lane-dense)
    """
    hidden = emb_ref[0] + dec_ref[0]                                 # (ts, H) bf16
    out_ref[0] = jnp.dot(hidden, et_ref[...],
                         preferred_element_type=jnp.float32).astype(out_ref.dtype)


def sentence_autoencoder_forward(input_ids, attention_mask, emb_table, w_dec,
                                 *, ts=None, tv=None):
    """input_ids: [B, S] int32, attention_mask: [B, S] (0/1),
    emb_table: [V, H] f32, w_dec: [H, H] f32.
    Returns (logits [B, S, V] bf16, cmpr [B, H] f32)."""
    B, S = input_ids.shape
    V, H = emb_table.shape

    # Tile sizes: keep V lane-dense multiples of 128; S tile is full S for small S.
    ts = (S if S <= 256 else 256) if ts is None else ts
    tv = (V if V <= 512 else 512) if tv is None else tv
    # TODO(synk): pad/mask the last partial tile for non-divisible realistic shapes.
    assert S % ts == 0 and V % tv == 0, "toy/demo shapes must divide tile sizes"

    # Glue (plain JAX): bf16 embedding gather (data-dependent) and mask cast.
    emb_table_bf16 = emb_table.astype(jnp.bfloat16)
    emb = jnp.take(emb_table_bf16, input_ids, axis=0)                # (B, S, H) bf16
    mask = attention_mask.astype(jnp.float32)[..., None]             # (B, S, 1)

    # ---- compress(): tiny per-sentence kernel -> cmpr (f32) and dec (bf16) ----
    cmpr, dec = pl.pallas_call(
        _compress_kernel,
        out_shape=(
            jax.ShapeDtypeStruct((B, 1, H), jnp.float32),
            jax.ShapeDtypeStruct((B, 1, H), jnp.bfloat16),
        ),
        grid_spec=pltpu.PrefetchScalarGridSpec(
            num_scalar_prefetch=0,
            grid=(B,),
            in_specs=[
                pl.BlockSpec((1, S, H), lambda b: (b, 0, 0)),
                pl.BlockSpec((1, S, 1), lambda b: (b, 0, 0)),
                pl.BlockSpec((H, H), lambda b: (0, 0)),
            ],
            out_specs=[
                pl.BlockSpec((1, 1, H), lambda b: (b, 0, 0)),
                pl.BlockSpec((1, 1, H), lambda b: (b, 0, 0)),
            ],
        ),
        compiler_params=pltpu.CompilerParams(
            dimension_semantics=("parallel",)),
    )(emb, mask, w_dec.astype(jnp.float32))

    # ---- causal_lm(): tiled bf16 GEMM over (V-tiles, B, S-tiles), H resident ----
    # One-time wrapper-side layout plumbing: present the tied embedding table with
    # the contraction (H) on its leading dim so the kernel RHS is (H, tv).
    e_t = emb_table_bf16.T                                           # (H, V) bf16

    nv, nm = V // tv, S // ts
    flops = 2 * B * S * H * V
    bytes_accessed = 2 * (nv * B * S * H + V * H + B * S * V + B * H)

    logits = pl.pallas_call(
        _logits_kernel,
        out_shape=jax.ShapeDtypeStruct((B, S, V), jnp.bfloat16),
        grid_spec=pltpu.PrefetchScalarGridSpec(
            num_scalar_prefetch=0,
            grid=(nv, B, nm),
            in_specs=[
                pl.BlockSpec((1, ts, H), lambda v, b, m: (b, m, 0)),
                pl.BlockSpec((1, 1, H), lambda v, b, m: (b, 0, 0)),
                pl.BlockSpec((H, tv), lambda v, b, m: (0, v)),
            ],
            out_specs=pl.BlockSpec((1, ts, tv), lambda v, b, m: (b, m, v)),
        ),
        compiler_params=pltpu.CompilerParams(
            dimension_semantics=("parallel", "parallel", "parallel")),
        cost_estimate=pl.CostEstimate(flops=flops, transcendentals=0,
                                      bytes_accessed=bytes_accessed),
    )(emb, dec, e_t)

    return logits, cmpr[:, 0, :]


def _reference_forward(input_ids, attention_mask, emb_table, w_dec):
    """Pure-JAX reference mirroring the kernel's bf16 operand quantization."""
    et_bf16 = emb_table.astype(jnp.bfloat16)
    emb_bf = jnp.take(et_bf16, input_ids, axis=0)                    # (B, S, H) bf16
    emb_f32 = emb_bf.astype(jnp.float32)
    mask = attention_mask.astype(jnp.float32)[..., None]
    denom = jnp.maximum(jnp.sum(mask, axis=1), 1.0)
    cmpr = jnp.sum(emb_f32 * mask, axis=1) / denom                   # (B, H) f32
    dec = jnp.tanh(cmpr @ w_dec).astype(jnp.bfloat16)                # (B, H) bf16
    hidden = emb_bf + dec[:, None, :]                                # bf16
    logits = jnp.einsum("bsh,hv->bsv",
                        hidden.astype(jnp.float32),
                        et_bf16.T.astype(jnp.float32))
    return logits, cmpr


if __name__ == "__main__":
    B, S, H, V = 2, 8, 128, 256

    key = jax.random.PRNGKey(0)
    k_emb, k_w, k_ids = jax.random.split(key, 3)

    # Deterministic synthetic parameters (shapes implied by the module API).
    emb_table = jax.random.normal(k_emb, (V, H), jnp.float32) * 0.02
    w_dec = jax.random.normal(k_w, (H, H), jnp.float32) * 0.02

    input_ids = jax.random.randint(k_ids, (B, S), 0, V, dtype=jnp.int32)
    attention_mask = jnp.array(
        [[1, 1, 1, 1, 1, 1, 0, 0],
         [1, 1, 1, 1, 0, 0, 0, 0]], dtype=jnp.int32)

    # tv=128 exercises the tiled-V grid (V=256 -> 2 vocab tiles).
    logits, cmpr = sentence_autoencoder_forward(
        input_ids, attention_mask, emb_table, w_dec, tv=128)
    jax.block_until_ready((logits, cmpr))

    ref_logits, ref_cmpr = _reference_forward(
        input_ids, attention_mask, emb_table, w_dec)

    assert jnp.allclose(logits.astype(jnp.float32), ref_logits,
                        atol=2e-4, rtol=1e-2)
    assert jnp.allclose(cmpr, ref_cmpr, atol=1e-5, rtol=1e-4)

    print("KERNEL_OK")
</pallas_src>

<mosaic_0001>
module attributes {stable_mosaic.version = 11 : i64} {
  func.func @_compress_kernel(%arg0: i32, %arg1: memref<1x8x128xbf16, #tpu.memory_space<vmem>>, %arg2: memref<1x8x1xf32, #tpu.memory_space<vmem>>, %arg3: memref<128x128xf32, #tpu.memory_space<vmem>>, %arg4: memref<1x1x128xf32, #tpu.memory_space<vmem>>, %arg5: memref<1x1x128xbf16, #tpu.memory_space<vmem>>) attributes {dimension_semantics = [#tpu.dimension_semantics<parallel>], iteration_bounds = array<i64: 2>, scalar_prefetch = 0 : i64, scratch_operands = 0 : i64, tpu.core_type = #tpu.core_type<tc>, window_params = [{transform_indices = @transform_0, window_bounds = array<i64: 1, 8, 128>}, {transform_indices = @transform_1, window_bounds = array<i64: 1, 8, 1>}, {pipeline_mode = #tpu.pipeline_mode<synchronous>, transform_indices = @transform_2, window_bounds = array<i64: 128, 128>}, {transform_indices = @transform_3, window_bounds = array<i64: 1, 1, 128>}, {transform_indices = @transform_4, window_bounds = array<i64: 1, 1, 128>}]} {
    %c0 = arith.constant 0 : index
    %c0_0 = arith.constant 0 : index
    %c0_1 = arith.constant 0 : index
    %0 = vector.load %arg1[%c0, %c0_0, %c0_1] : memref<1x8x128xbf16, #tpu.memory_space<vmem>>, vector<1x8x128xbf16>
    %1 = vector.shape_cast %0 : vector<1x8x128xbf16> to vector<8x128xbf16>
    %2 = arith.extf %1 : vector<8x128xbf16> to vector<8x128xf32>
    %c0_2 = arith.constant 0 : index
    %c0_3 = arith.constant 0 : index
    %c0_4 = arith.constant 0 : index
    %3 = vector.load %arg2[%c0_2, %c0_3, %c0_4] : memref<1x8x1xf32, #tpu.memory_space<vmem>>, vector<1x8x1xf32>
    %4 = vector.shape_cast %3 : vector<1x8x1xf32> to vector<8x1xf32>
    %5 = vector.shape_cast %4 : vector<8x1xf32> to vector<1x8x1xf32>
    %cst = arith.constant dense<0.000000e+00> : vector<1xf32>
    %6 = vector.multi_reduction <add>, %5, %cst [1, 2] : vector<1x8x1xf32> to vector<1xf32>
    %7 = vector.shape_cast %6 : vector<1xf32> to vector<1x1x1xf32>
    %8 = vector.extract %7[0, 0, 0] : f32 from vector<1x1x1xf32>
    %cst_5 = arith.constant 1.000000e+00 : f32
    %9 = arith.maximumf %8, %cst_5 : f32
    %10 = vector.broadcast %4 : vector<8x1xf32> to vector<8x128xf32>
    %11 = arith.mulf %2, %10 : vector<8x128xf32>
    %cst_6 = arith.constant dense<0.000000e+00> : vector<128xf32>
    %12 = vector.multi_reduction <add>, %11, %cst_6 [0] : vector<8x128xf32> to vector<128xf32>
    %13 = vector.shape_cast %12 : vector<128xf32> to vector<1x128xf32>
    %14 = vector.broadcast %9 : f32 to vector<1x128xf32>
    %15 = arith.divf %13, %14 : vector<1x128xf32>
    %c0_7 = arith.constant 0 : index
    %c0_8 = arith.constant 0 : index
    %16 = vector.load %arg3[%c0_7, %c0_8] : memref<128x128xf32, #tpu.memory_space<vmem>>, vector<128x128xf32>
    %cst_9 = arith.constant dense<0.000000e+00> : vector<1x128xf32>
    %17 = tpu.matmul %15, %16, %cst_9 {dimension_numbers = #tpu.dot_dimension_numbers<[1], [0], [0], [1], [0, 0, 1, 1], [], []>} : vector<1x128xf32>, vector<128x128xf32>, vector<1x128xf32> -> vector<1x128xf32>
    %18 = math.tanh %17 : vector<1x128xf32>
    %c0_10 = arith.constant 0 : index
    %c0_11 = arith.constant 0 : index
    %c0_12 = arith.constant 0 : index
    %19 = vector.load %arg4[%c0_10, %c0_11, %c0_12] : memref<1x1x128xf32, #tpu.memory_space<vmem>>, vector<1x1x128xf32>
    %20 = vector.shape_cast %19 : vector<1x1x128xf32> to vector<1x128xf32>
    %21 = vector.shape_cast %15 : vector<1x128xf32> to vector<1x1x128xf32>
    tpu.vector_store %arg4[%c0_10, %c0_11, %c0_12], %21 {strides = array<i32>} : memref<1x1x128xf32, #tpu.memory_space<vmem>>, vector<1x1x128xf32>,
    %22 = arith.truncf %18 : vector<1x128xf32> to vector<1x128xbf16>
    %c0_13 = arith.constant 0 : index
    %c0_14 = arith.constant 0 : index
    %c0_15 = arith.constant 0 : index
    %23 = vector.load %arg5[%c0_13, %c0_14, %c0_15] : memref<1x1x128xbf16, #tpu.memory_space<vmem>>, vector<1x1x128xbf16>
    %24 = vector.shape_cast %23 : vector<1x1x128xbf16> to vector<1x128xbf16>
    %25 = vector.shape_cast %22 : vector<1x128xbf16> to vector<1x1x128xbf16>
    tpu.vector_store %arg5[%c0_13, %c0_14, %c0_15], %25 {strides = array<i32>} : memref<1x1x128xbf16, #tpu.memory_space<vmem>>, vector<1x1x128xbf16>,
    return
  }
  func.func @transform_0(%arg0: i32) -> (i32, i32, i32) {
    %c0_i32 = arith.constant 0 : i32
    %c0_i32_0 = arith.constant 0 : i32
    %c0_i32_1 = arith.constant 0 : i32
    return %arg0, %c0_i32, %c0_i32_0 : i32, i32, i32
  }
  func.func @transform_1(%arg0: i32) -> (i32, i32, i32) {
    %c0_i32 = arith.constant 0 : i32
    %c0_i32_0 = arith.constant 0 : i32
    %c0_i32_1 = arith.constant 0 : i32
    return %arg0, %c0_i32, %c0_i32_0 : i32, i32, i32
  }
  func.func @transform_2(%arg0: i32) -> (i32, i32) {
    %c0_i32 = arith.constant 0 : i32
    %c0_i32_0 = arith.constant 0 : i32
    %c0_i32_1 = arith.constant 0 : i32
    return %c0_i32, %c0_i32_0 : i32, i32
  }
  func.func @transform_3(%arg0: i32) -> (i32, i32, i32) {
    %c0_i32 = arith.constant 0 : i32
    %c0_i32_0 = arith.constant 0 : i32
    %c0_i32_1 = arith.constant 0 : i32
    return %arg0, %c0_i32, %c0_i32_0 : i32, i32, i32
  }
  func.func @transform_4(%arg0: i32) -> (i32, i32, i32) {
    %c0_i32 = arith.constant 0 : i32
    %c0_i32_0 = arith.constant 0 : i32
    %c0_i32_1 = arith.constant 0 : i32
    return %arg0, %c0_i32, %c0_i32_0 : i32, i32, i32
  }
}

</mosaic_0001>

<llo_original>
// kernel: tpu_custom_call.1
$region0: #{tpu_custom_call.1}
  #allocation0 [shape = 'u32[]', space=smem, size = 0x4, offset = 0x4, fixed_abs, tag = 'smem constant byte address 0x4 - core index']
  #allocation1 [shape = 'u32[144,128]{1,0:T(1,128)}', space=vmem, size = 0x12000, scoped, tag = 'internal scratch']
  %s0 = inlined_call_operand.vmem [shape: bf16[2,8,128], index: 0, kind: input, shape index: {}]
  %s1 = inlined_call_operand.vmem [shape: f32[2,8,1], index: 1, kind: input, shape index: {}]
  %s2 = inlined_call_operand.hbm [shape: f32[128,128], index: 2, kind: input, shape index: {}]
  %s3 = inlined_call_operand.hbm [shape: f32[2,1,128], index: 3, kind: output, shape index: {0}]
  %s4 = inlined_call_operand.vmem [shape: bf16[2,1,128], index: 4, kind: output, shape index: {1}]
  %5 = xla_tuple %s3, %s4
  %s6 = sld [smem:[#allocation0]]
  $region57: #{tpu_custom_call.1} parent=0
    _
  %s8 = ssub.s32 1, %s6
  %s9 = scalar_select 0, %s8, %s6
  $region1: #{tpu_custom_call.1} parent=0
    #allocation2 [shape = 'u8[65536]{0}', space=vmem, size = 0x10000, scoped, tag = 'input window, operand 2, single buffered']
    #allocation3 [shape = 's32[2]{0}', space=sflag, size = 0x8, scoped, tag = 'scoped memory for tpu_custom_call.1']
    #allocation4 [shape = 's32[2]{0}', space=sflag, size = 0x8, scoped, tag = 'scoped memory for tpu_custom_call.1']
    #allocation5 [shape = 'u8[1024]{0}', space=vmem, size = 0x400, scoped, tag = 'output window, operand 0']
    %10 = vsyncpa [#allocation3], 0
    %11 = vsyncpa [#allocation4], 0
    %s12 = scalar_lea.sflag [#allocation4], 1
    %13 = vsyncpa %s12, 0
    loop: start=0, step=1, limit=4
    $region2: #{tpu_custom_call.1} parent=1 // loop_pre_header
      _
    $region3: #{tpu_custom_call.1} parent=1 // loop_header
      %s15 = sphi 0, %s19
      %p16 = scmp.ge.s32.totalorder %s15, 4
      %s25 = sphi 0, %s27
      %s28 = sphi 0, %s25
      %s29 = sphi 0, %s28
      %s45 = sphi 0, %s29
      %s51 = sphi 0, %s53
      %s54 = sphi 0, %s51
      %s55 = sphi 0, %s54
      %s71 = sphi 0, %s55
      %s75 = sphi 0, %s75
      %s77 = sphi 0, %s75
      %s78 = sphi 0, %s77
      %s92 = sphi 0, %s78
      %s98 = sphi 0, %s100
      %s101 = sphi 0, %s98
      %s102 = sphi 0, %s101
      %s118 = sphi 0, %s102
      %s124 = sphi 0, %s126
      %s127 = sphi 0, %s124
      %s128 = sphi 0, %s127
      %s144 = sphi 0, %s128
    $region4: #{tpu_custom_call.1} parent=1 // loop_header_branch
      %18 = sbr.rel (%p16) target = $region8
    $region5: #{tpu_custom_call.1} parent=1 // loop_body
      %s20 = ssub.s32 %s15, 1
      %s21 = ssub.s32 %s15, 2
      %s22 = sadd.s32 %s15, 1
      %s23 = ssub.s32 %s15, %s22
      %p24 = scmp.eq.s32.totalorder %s23, 0
      %s26 = sadd.s32 %s25, 1
      %s27 = scalar_select %p24, %s25, %s26
      %p30 = pneg %p24
      %p31 = scmp.eq.s32.totalorder %s15, 1
      %p32 = por %p30, %p31
      %p33 = scmp.ne.s32.totalorder %s25, %s28
      %p34 = scmp.eq.s32.totalorder %s15, 0
      %p35 = por %p33, %p34
      %p36 = scmp.ne.s32.totalorder %s25, %s28
      %p37 = scmp.eq.s32.totalorder %s20, 1
      %p38 = por %p36, %p37
      %p39 = scmp.ne.s32.totalorder %s28, %s29
      %p40 = scmp.eq.s32.totalorder %s20, 0
      %p41 = por %p39, %p40
      %p42 = scmp.ne.s32.totalorder %s28, %s29
      %p43 = scmp.eq.s32.totalorder %s21, 1
      %p44 = por %p42, %p43
      %p46 = scmp.ne.s32.totalorder %s29, %s45
      %p47 = scmp.eq.s32.totalorder %s21, 0
      %p48 = por %p46, %p47
      %s49 = ssub.s32 %s15, %s22
      %p50 = scmp.eq.s32.totalorder %s49, 0
      %s52 = sadd.s32 %s51, 1
      %s53 = scalar_select %p50, %s51, %s52
      %p56 = pneg %p50
      %p57 = scmp.eq.s32.totalorder %s15, 1
      %p58 = por %p56, %p57
      %p59 = scmp.ne.s32.totalorder %s51, %s54
      %p60 = scmp.eq.s32.totalorder %s15, 0
      %p61 = por %p59, %p60
      %p62 = scmp.ne.s32.totalorder %s51, %s54
      %p63 = scmp.eq.s32.totalorder %s20, 1
      %p64 = por %p62, %p63
      %p65 = scmp.ne.s32.totalorder %s54, %s55
      %p66 = scmp.eq.s32.totalorder %s20, 0
      %p67 = por %p65, %p66
      %p68 = scmp.ne.s32.totalorder %s54, %s55
      %p69 = scmp.eq.s32.totalorder %s21, 1
      %p70 = por %p68, %p69
      %p72 = scmp.ne.s32.totalorder %s55, %s71
      %p73 = scmp.eq.s32.totalorder %s21, 0
      %p74 = por %p72, %p73
      %s76 = sadd.s32 %s75, 1
      %p79 = scmp.eq.s32.totalorder %s15, 1
      %p80 = scmp.ne.s32.totalorder %s75, %s77
      %p81 = scmp.eq.s32.totalorder %s15, 0
      %p82 = por %p80, %p81
      %p83 = scmp.ne.s32.totalorder %s75, %s77
      %p84 = scmp.eq.s32.totalorder %s20, 1
      %p85 = por %p83, %p84
      %p86 = scmp.ne.s32.totalorder %s77, %s78
      %p87 = scmp.eq.s32.totalorder %s20, 0
      %p88 = por %p86, %p87
      %p89 = scmp.ne.s32.totalorder %s77, %s78
      %p90 = scmp.eq.s32.totalorder %s21, 1
      %p91 = por %p89, %p90
      %p93 = scmp.ne.s32.totalorder %s78, %s92
      %p94 = scmp.eq.s32.totalorder %s21, 0
      %p95 = por %p93, %p94
      %s96 = ssub.s32 %s15, %s22
      %p97 = scmp.eq.s32.totalorder %s96, 0
      %s99 = sadd.s32 %s98, 1
      %s100 = scalar_select %p97, %s98, %s99
      %p103 = pneg %p97
      %p104 = scmp.eq.s32.totalorder %s15, 1
      %p105 = por %p103, %p104
      %p106 = scmp.ne.s32.totalorder %s98, %s101
      %p107 = scmp.eq.s32.totalorder %s15, 0
      %p108 = por %p106, %p107
      %p109 = scmp.ne.s32.totalorder %s98, %s101
      %p110 = scmp.eq.s32.totalorder %s20, 1
      %p111 = por %p109, %p110
      %p112 = scmp.ne.s32.totalorder %s101, %s102
      %p113 = scmp.eq.s32.totalorder %s20, 0
      %p114 = por %p112, %p113
      %p115 = scmp.ne.s32.totalorder %s101, %s102
      %p116 = scmp.eq.s32.totalorder %s21, 1
      %p117 = por %p115, %p116
      %p119 = scmp.ne.s32.totalorder %s102, %s118
      %p120 = scmp.eq.s32.totalorder %s21, 0
      %p121 = por %p119, %p120
      %s122 = ssub.s32 %s15, %s22
      %p123 = scmp.eq.s32.totalorder %s122, 0
      %s125 = sadd.s32 %s124, 1
      %s126 = scalar_select %p123, %s124, %s125
      %p129 = pneg %p123
      %p130 = scmp.eq.s32.totalorder %s15, 1
      %p131 = por %p129, %p130
      %p132 = scmp.ne.s32.totalorder %s124, %s127
      %p133 = scmp.eq.s32.totalorder %s15, 0
      %p134 = por %p132, %p133
      %p135 = scmp.ne.s32.totalorder %s124, %s127
      %p136 = scmp.eq.s32.totalorder %s20, 1
      %p137 = por %p135, %p136
      %p138 = scmp.ne.s32.totalorder %s127, %s128
      %p139 = scmp.eq.s32.totalorder %s20, 0
      %p140 = por %p138, %p139
      %p141 = scmp.ne.s32.totalorder %s127, %s128
      %p142 = scmp.eq.s32.totalorder %s21, 1
      %p143 = por %p141, %p142
      %p145 = scmp.ne.s32.totalorder %s128, %s144
      %p146 = scmp.eq.s32.totalorder %s21, 0
      %p147 = por %p145, %p146
      %p148 = scmp.le.s32.totalorder 1, %s15
      %p149 = scmp.lt.s32.totalorder %s15, 3
      %p150 = pnand %p148, %p149
      %p151 = pneg %p150
      // Predicated region
      $region9: #{tpu_custom_call.1} parent=5 // pred_check
        _
      $region10: #{tpu_custom_call.1} parent=5 // pred_check_branch
        %153 = sbr.rel (%p150) target = $region12
      $region11: #{tpu_custom_call.1} parent=5 // pred_region
        %s154 = ssub.s32 %s15, 1
        // Predicated region
        $region13: #{tpu_custom_call.1} parent=11 // pred_check
          %p155 = pneg %p88
        $region14: #{tpu_custom_call.1} parent=11 // pred_check_branch
          %157 = sbr.rel (%p155) target = $region16
        $region15: #{tpu_custom_call.1} parent=11 // pred_region
          %s159 = ssub.s32 2048, 2048
          %160 = vsyncadd [#allocation3], %s159
          %s161 = sshll.u32 [#allocation2], 4
          %s162 = int_to_ptr.vmem [resolvable:$true] %s161
          %167 = dma.hbm_to_vmem [thread:$0]  %s2, 2048, %s162, [#allocation3], 128, 128, 8
        $region16: #{tpu_custom_call.1} parent=11 // pred_fallthru
          _
      $region12: #{tpu_custom_call.1} parent=5 // pred_fallthru
        _
      %p168 = scmp.lt.s32.totalorder %s15, 2
      // Predicated region
      $region17: #{tpu_custom_call.1} parent=5 // pred_check
        %p169 = pneg %p168
      $region18: #{tpu_custom_call.1} parent=5 // pred_check_branch
        %171 = sbr.rel (%p169) target = $region20
      $region19: #{tpu_custom_call.1} parent=5 // pred_region
        // Predicated region
        $region21: #{tpu_custom_call.1} parent=19 // pred_check
          %p172 = pneg %p35
        $region22: #{tpu_custom_call.1} parent=19 // pred_check_branch
          %174 = sbr.rel (%p172) target = $region24
        $region23: #{tpu_custom_call.1} parent=19 // pred_region
          %p175 = scmp.lt.s32.totalorder %s15, 1
          %s176 = scalar_select %p175, %s15, 1
          %s177 = smul.addr %s176, 4
          %s178 = scalar_lea.vmem %s0, %s177
        $region24: #{tpu_custom_call.1} parent=19 // pred_fallthru
          _
        // Predicated region
        $region25: #{tpu_custom_call.1} parent=19 // pred_check
          %p179 = pneg %p61
        $region26: #{tpu_custom_call.1} parent=19 // pred_check_branch
          %181 = sbr.rel (%p179) target = $region28
        $region27: #{tpu_custom_call.1} parent=19 // pred_region
          %p182 = scmp.lt.s32.totalorder %s15, 1
          %s183 = scalar_select %p182, %s15, 1
          %s184 = smul.addr %s183, 8
          %s185 = scalar_lea.vmem %s1, %s184
        $region28: #{tpu_custom_call.1} parent=19 // pred_fallthru
          _
      $region20: #{tpu_custom_call.1} parent=5 // pred_fallthru
        _
      %p186 = scmp.le.s32.totalorder 1, %s15
      %p187 = scmp.lt.s32.totalorder %s15, 3
      %p188 = pnand %p186, %p187
      %p189 = pneg %p188
      // Predicated region
      $region29: #{tpu_custom_call.1} parent=5 // pred_check
        _
      $region30: #{tpu_custom_call.1} parent=5 // pred_check_branch
        %191 = sbr.rel (%p188) target = $region32
      $region31: #{tpu_custom_call.1} parent=5 // pred_region
        %s192 = ssub.s32 %s15, 1
        // Predicated region
        $region33: #{tpu_custom_call.1} parent=31 // pred_check
          %p193 = pneg %p88
        $region34: #{tpu_custom_call.1} parent=31 // pred_check_branch
          %195 = sbr.rel (%p193) target = $region36
        $region35: #{tpu_custom_call.1} parent=31 // pred_region
          %196 = dma.done [#allocation3], 2048
        $region36: #{tpu_custom_call.1} parent=31 // pred_fallthru
          _
        %p197 = scmp.lt.s32.totalorder %s20, 1
        %s198 = scalar_select %p197, %s20, 1
        %s199 = smul.addr %s198, 4
        %s200 = scalar_lea.vmem %s0, %s199
        %p201 = pneg %p41
        %p202 = pneg %p38
        %p203 = scmp.lt.s32.totalorder %s20, 1
        %s204 = scalar_select %p203, %s20, 1
        %s205 = smul.addr %s204, 8
        %s206 = scalar_lea.vmem %s1, %s205
        %p207 = pneg %p67
        %p208 = pneg %p64
        %p209 = pneg %p88
        %p210 = pneg %p85
        %p211 = pneg %p114
        %p212 = pneg %p111
        %s213 = sand.u32 %s101, 1
        %s214 = scalar_lea.sflag [#allocation4], %s213
        %s215 = sand.u32 %s101, 1
        %s216 = scalar_lea.vmem [#allocation5], %s215
        %p217 = pneg %p140
        %p218 = pneg %p137
        %p219 = scmp.lt.s32.totalorder %s20, 1
        %s220 = scalar_select %p219, %s20, 1
        %s221 = scalar_lea.vmem %s4, %s220
        %p222 = scmp.lt.s32.totalorder %s20, 1
        %s223 = scalar_select %p222, %s20, 1
        %s224 = smul.addr %s223, 4
        %s225 = scalar_lea.vmem %s0, %s224
        %p226 = scmp.lt.s32.totalorder %s20, 1
        %s227 = scalar_select %p226, %s20, 1
        %s228 = smul.addr %s227, 8
        %s229 = scalar_lea.vmem %s1, %s228
        %p230 = scmp.lt.s32.totalorder %s20, 1
        %s231 = scalar_select %p230, %s20, 1
        %s232 = scalar_lea.vmem %s4, %s231
        %v233 = vld [vmem:[%s225] sm:$0xf]
        %v234 = vunpack.c.l.bf16 %v233
        %v235 = vld [vmem:[%s229] sm:$0xff]
        %vm236 = vcmask 7168
        %v237 = vsel %vm236, %v235, 0.0
        %238 = vadd.xlane.f32.xlu0 %v237
        %v239 = vpop.xlane.xlu0 %238
        %v240 = vrot.slane %v239, 4
        %v241 = vadd.f32 %v239, %v240
        %v242 = vrot.slane %v241, 2
        %v243 = vadd.f32 %v241, %v242
        %v244 = vrot.slane %v243, 1
        %v245 = vadd.f32 %v243, %v244
        %s246 = vtos %v245
        %s247 = smax.f32 %s246, 1.0
        %249 = vset.pattern.permute.xlu0 0
        %250 = vperm.xlu0 %249, %v235
        %v251 = vpop.permute.xlu0 %250
        %v253 = vmul.f32 %v234, %v251
        %v254 = vrot.slane %v253, 4
        %v255 = vadd.f32 %v253, %v254
        %v256 = vrot.slane %v255, 2
        %v257 = vadd.f32 %v255, %v256
        %v258 = vrot.slane %v257, 1
        %v259 = vadd.f32 %v257, %v258
        %v260 = vstv %s247
        %v261 = vrcp.pop %v260
        %v262 = vmul.f32 %v259, %v261
        %v263 = vld [vmem:[#allocation2] sm:$0xff]
        %v264 = vld [vmem:[#allocation2 + $0x8] sm:$0xff]
        %v265 = vld [vmem:[#allocation2 + $0x10] sm:$0xff]
        %v266 = vld [vmem:[#allocation2 + $0x18] sm:$0xff]
        %v267 = vld [vmem:[#allocation2 + $0x20] sm:$0xff]
        %v268 = vld [vmem:[#allocation2 + $0x28] sm:$0xff]
        %v269 = vld [vmem:[#allocation2 + $0x30] sm:$0xff]
        %v270 = vld [vmem:[#allocation2 + $0x38] sm:$0xff]
        %v271 = vld [vmem:[#allocation2 + $0x40] sm:$0xff]
        %v272 = vld [vmem:[#allocation2 + $0x48] sm:$0xff]
        %v273 = vld [vmem:[#allocation2 + $0x50] sm:$0xff]
        %v274 = vld [vmem:[#allocation2 + $0x58] sm:$0xff]
        %v275 = vld [vmem:[#allocation2 + $0x60] sm:$0xff]
        %v276 = vld [vmem:[#allocation2 + $0x68] sm:$0xff]
        %v277 = vld [vmem:[#allocation2 + $0x70] sm:$0xff]
        %v278 = vld [vmem:[#allocation2 + $0x78] sm:$0xff]
        %279 = vmatprep.subr.mxu0 0.0
        %280 = vmatpush1.msra.mxu0 %v263
        %281 = vmatprep.subr.mxu0 0.0
        %282 = vmatpush1.msra.mxu0 %v264
        %283 = vmatprep.subr.mxu0 0.0
        %284 = vmatpush1.msra.mxu0 %v265
        %285 = vmatprep.subr.mxu0 0.0
        %286 = vmatpush1.msra.mxu0 %v266
        %287 = vmatprep.subr.mxu0 0.0
        %288 = vmatpush1.msra.mxu0 %v267
        %289 = vmatprep.subr.mxu0 0.0
        %290 = vmatpush1.msra.mxu0 %v268
        %291 = vmatprep.subr.mxu0 0.0
        %292 = vmatpush1.msra.mxu0 %v269
        %293 = vmatprep.subr.mxu0 0.0
        %294 = vmatpush1.msra.mxu0 %v270
        %295 = vmatprep.subr.mxu0 0.0
        %296 = vmatpush1.msra.mxu0 %v271
        %297 = vmatprep.subr.mxu0 0.0
        %298 = vmatpush1.msra.mxu0 %v272
        %299 = vmatprep.subr.mxu0 0.0
        %300 = vmatpush1.msra.mxu0 %v273
        %301 = vmatprep.subr.mxu0 0.0
        %302 = vmatpush1.msra.mxu0 %v274
        %303 = vmatprep.subr.mxu0 0.0
        %304 = vmatpush1.msra.mxu0 %v275
        %305 = vmatprep.subr.mxu0 0.0
        %306 = vmatpush1.msra.mxu0 %v276
        %307 = vmatprep.subr.mxu0 0.0
        %308 = vmatpush1.msra.mxu0 %v277
        %309 = vmatprep.subr.mxu0 0.0
        %310 = vmatpush1.msra.mxu0 %v278
        %311 = vmatprep.subr.mxu0 0.0
        %312 = vmatpush1.msra.mxu0 0.0
        %313 = vmatprep.subr.mxu0 0.0
        %314 = vmatpush1.msra.mxu0 0.0
        %315 = vmatprep.subr.mxu0 0.0
        %316 = vmatpush1.msra.mxu0 0.0
        %317 = vmatprep.subr.mxu0 0.0
        %318 = vmatpush1.msra.mxu0 0.0
        %319 = vmatprep.subr.mxu0 0.0
        %320 = vmatpush1.msra.mxu0 0.0
        %321 = vmatprep.subr.mxu0 0.0
        %322 = vmatpush1.msra.mxu0 0.0
        %323 = vmatprep.subr.mxu0 0.0
        %324 = vmatpush1.msra.mxu0 0.0
        %325 = vmatprep.subr.mxu0 0.0
        %326 = vmatpush1.msra.mxu0 0.0
        %327 = vmatprep.subr.mxu0 0.0
        %328 = vmatpush1.msra.mxu0 0.0
        %329 = vmatprep.subr.mxu0 0.0
        %330 = vmatpush1.msra.mxu0 0.0
        %331 = vmatprep.subr.mxu0 0.0
        %332 = vmatpush1.msra.mxu0 0.0
        %333 = vmatprep.subr.mxu0 0.0
        %334 = vmatpush1.msra.mxu0 0.0
        %335 = vmatprep.subr.mxu0 0.0
        %336 = vmatpush1.msra.mxu0 0.0
        %337 = vmatprep.subr.mxu0 0.0
        %338 = vmatpush1.msra.mxu0 0.0
        %339 = vmatprep.subr.mxu0 0.0
        %340 = vmatpush1.msra.mxu0 0.0
        %341 = vmatprep.subr.mxu0 0.0
        %342 = vmatpush1.msra.mxu0 0.0
        %343 = vmatprep.mubr.f32.mxu0 0.0
        %344 = vmatmul.mubr.f32.gmra.mrb[0].mxu0 %v262
        %v345 = vpop.f32.mrb[0].mxu0
        %v346 = vadd.f32 0.0, %v345
        %v347 = vpop.f32.mrb[0].mxu0
        %348 = vdwg.mxu0
        %v349 = vtanh.pop %v346
        %350 = vst [vmem:[%s216] sm:$0x1] %v262
        %v351 = vpack.c.bf16 %v349, %v349
        %vm352 = vcmask 1040384
        %vm353 = vsmask.f32 256
        %vm354 = vmand %vm352, %vm353
        %v355 = vld [vmem:[%s232] sm:$0x1]
        %v356 = vsel %vm354, %v351, %v355
        %357 = vst [vmem:[%s232] sm:$0x1] %v356
        %s358 = sand.u32 %s101, 1
        %s359 = scalar_lea.sflag [#allocation4], %s358
        %s360 = sand.u32 %s101, 1
        %s361 = scalar_lea.vmem [#allocation5], %s360
        %p362 = scmp.lt.s32.totalorder %s20, 1
        %s363 = scalar_select %p362, %s20, 1
        %s364 = scalar_lea.vmem %s4, %s363
        // Predicated region
        $region37: #{tpu_custom_call.1} parent=31 // pred_check
          %p365 = pneg %p111
        $region38: #{tpu_custom_call.1} parent=31 // pred_check_branch
          %367 = sbr.rel (%p365) target = $region40
        $region39: #{tpu_custom_call.1} parent=31 // pred_region
          %s369 = ssub.s32 16, 16
          %370 = vsyncadd %s359, %s369
          %s371 = smul.addr %s20, 16
          %s372 = scalar_lea.hbm %s3, %s371
          %s374 = sshll.u32 %s361, 4
          %s375 = int_to_ptr.vmem [resolvable:$true] %s374
          %377 = dma.vmem_to_hbm [thread:$0]  %s375, 16, %s372, %s359
        $region40: #{tpu_custom_call.1} parent=31 // pred_fallthru
          _
        // Predicated region
        $region41: #{tpu_custom_call.1} parent=31 // pred_check
          %p378 = pneg %p137
        $region42: #{tpu_custom_call.1} parent=31 // pred_check_branch
          %380 = sbr.rel (%p378) target = $region44
        $region43: #{tpu_custom_call.1} parent=31 // pred_region
          _
        $region44: #{tpu_custom_call.1} parent=31 // pred_fallthru
          _
      $region32: #{tpu_custom_call.1} parent=5 // pred_fallthru
        _
      %p381 = scmp.le.s32.totalorder 2, %s15
      // Predicated region
      $region45: #{tpu_custom_call.1} parent=5 // pred_check
        %p382 = pneg %p381
      $region46: #{tpu_custom_call.1} parent=5 // pred_check_branch
        %384 = sbr.rel (%p382) target = $region48
      $region47: #{tpu_custom_call.1} parent=5 // pred_region
        %s385 = ssub.s32 %s15, 2
        // Predicated region
        $region49: #{tpu_custom_call.1} parent=47 // pred_check
          %p386 = pneg %p117
        $region50: #{tpu_custom_call.1} parent=47 // pred_check_branch
          %388 = sbr.rel (%p386) target = $region52
        $region51: #{tpu_custom_call.1} parent=47 // pred_region
          %s389 = sand.u32 %s102, 1
          %s390 = scalar_lea.sflag [#allocation4], %s389
          %s391 = sand.u32 %s102, 1
          %s392 = scalar_lea.vmem [#allocation5], %s391
          %393 = dma.done %s390, 16
        $region52: #{tpu_custom_call.1} parent=47 // pred_fallthru
          _
        // Predicated region
        $region53: #{tpu_custom_call.1} parent=47 // pred_check
          %p394 = pneg %p143
        $region54: #{tpu_custom_call.1} parent=47 // pred_check_branch
          %396 = sbr.rel (%p394) target = $region56
        $region55: #{tpu_custom_call.1} parent=47 // pred_region
          %p397 = scmp.lt.s32.totalorder %s21, 1
          %s398 = scalar_select %p397, %s21, 1
          %s399 = scalar_lea.vmem %s4, %s398
        $region56: #{tpu_custom_call.1} parent=47 // pred_fallthru
          _
      $region48: #{tpu_custom_call.1} parent=5 // pred_fallthru
        _
    $region6: #{tpu_custom_call.1} parent=1 // loop_footer
      %s19 = sadd.s32 1, %s15
    $region7: #{tpu_custom_call.1} parent=1 // loop_footer_branch
      %14 = sbr.rel target = $region3
    $region8: #{tpu_custom_call.1} parent=1 // loop_exit
      _
    %400 = vsyncpa [#allocation3], 1
    %s401 = scalar_lea.sflag [#allocation3], 1
    %402 = vsyncpa %s401, 1
    %403 = vsyncpa [#allocation4], 1
    %s404 = scalar_lea.sflag [#allocation4], 1
    %405 = vsyncpa %s404, 1

</llo_original>
